<compile_context>
chip_gen: v7x
topology: tpu7x:2x2x1
jax: 0.10.0
libtpu: 0.0.40
codegen_flags: <defaults>
</compile_context>

<pallas_src>
import jax
import jax.numpy as jnp
from jax.experimental import pallas as pl
from jax.experimental.pallas import tpu as pltpu


def lstm_kernel(x_ref, w_ih_ref, w_hh_ref, b_ref, w_fc_ref, b_fc_ref, out_ref):
    """LSTM forward + fc(h_N).

    x_ref    : (B, T, D)  f32   (native batch_first layout, no wrapper transpose)
    w_ih_ref : (D, 4H)    bf16  (PyTorch weight_ih_l0.T)
    w_hh_ref : (H, 4H)    bf16  (PyTorch weight_hh_l0.T)
    b_ref    : (1, 4H)    f32   (= bias_ih_l0 + bias_hh_l0)
    w_fc_ref : (H, O)     bf16  (PyTorch fc.weight.T)
    b_fc_ref : (1, O)     f32
    out_ref  : (B, O)     f32
    Gate order follows PyTorch: [i, f, g, o].
    """
    B, T, D = x_ref.shape
    H = w_hh_ref.shape[0]

    # Hoisted input projection: ONE (B*T, D) x (D, 4H) bf16 MXU matmul with
    # f32 accumulation, plus a single bias broadcast.
    x_bf = x_ref[...].astype(jnp.bfloat16)
    pre = jnp.dot(x_bf.reshape(B * T, D), w_ih_ref[...],
                  preferred_element_type=jnp.float32)            # (B*T, 4H) f32
    pre_gates = pre.reshape(B, T, 4 * H) + b_ref[...]            # (B, T, 4H)

    w_hh = w_hh_ref[...]                                         # (H, 4H) bf16

    def sigmoid(z):
        # tanh form keeps everything on the EUP slot (no full-precision divide).
        return 0.5 * (jnp.tanh(0.5 * z) + 1.0)

    # --- t = 0: h = c = 0, so skip the recurrent matmul and the f*c term.
    g0 = pre_gates[:, 0, :]                                      # (B, 4H)
    s0 = sigmoid(g0)
    c = s0[:, 0:H] * jnp.tanh(g0[:, 2 * H:3 * H])                # i0 * g0
    h = s0[:, 3 * H:4 * H] * jnp.tanh(c)                         # o0 * tanh(c0)

    # --- remaining steps (T small & static -> full unroll, h/c live in vregs).
    for t in range(1, T):
        gates = pre_gates[:, t, :] + jnp.dot(
            h.astype(jnp.bfloat16), w_hh, preferred_element_type=jnp.float32)
        s = sigmoid(gates)           # one EUP pass over the whole (B, 4H) tile
        i_g = s[:, 0:H]
        f_g = s[:, H:2 * H]
        o_g = s[:, 3 * H:4 * H]
        g_g = jnp.tanh(gates[:, 2 * H:3 * H])
        c = f_g * c + i_g * g_g
        h = o_g * jnp.tanh(c)

    # --- Final Linear: fc(h_N)
    out_ref[...] = (jnp.dot(h.astype(jnp.bfloat16), w_fc_ref[...],
                            preferred_element_type=jnp.float32)
                    + b_fc_ref[...]).astype(out_ref.dtype)


def prepare_params(w_ih, w_hh, b_ih, b_hh, w_fc, b_fc):
    """One-time parameter prep (outside the per-forward path):
    transpose to row-major matmul layouts, cast matmul weights to bf16,
    pre-add the two LSTM biases."""
    H = w_hh.shape[1]
    O = w_fc.shape[0]
    return (
        jnp.asarray(w_ih.T, jnp.bfloat16),                        # (D, 4H)
        jnp.asarray(w_hh.T, jnp.bfloat16),                        # (H, 4H)
        (b_ih + b_hh).reshape(1, 4 * H).astype(jnp.float32),      # (1, 4H)
        jnp.asarray(w_fc.T, jnp.bfloat16),                        # (H, O)
        b_fc.reshape(1, O).astype(jnp.float32),                   # (1, O)
    )


def simple_lstm_forward(x, params):
    """x: (B, T, D) batch_first.  params from prepare_params.  Returns (B, O)."""
    w_ih_t, w_hh_t, b, w_fc_t, b_fc2 = params
    B, T, D = x.shape
    H = w_hh_t.shape[0]
    O = w_fc_t.shape[1]

    operands = (x.astype(jnp.float32), w_ih_t, w_hh_t, b, w_fc_t, b_fc2)
    cost = pl.CostEstimate(
        flops=(2 * B * T * D * 4 * H            # hoisted projection
               + 2 * (T - 1) * B * H * 4 * H    # recurrent matmuls (t=0 skipped)
               + 2 * B * H * O),                # final fc
        transcendentals=T * B * 6 * H,
        bytes_accessed=sum(int(a.size) * a.dtype.itemsize for a in operands)
                       + B * O * 4,
    )

    vmem = pl.BlockSpec(memory_space=pltpu.MemorySpace.VMEM)
    return pl.pallas_call(
        lstm_kernel,
        out_shape=jax.ShapeDtypeStruct((B, O), jnp.float32),
        in_specs=[vmem] * 6,
        out_specs=vmem,
        cost_estimate=cost,
    )(*operands)


def _reference_forward(x, w_ih, w_hh, b_ih, b_hh, w_fc, b_fc):
    """Pure-JAX f32 reference reproducing PyTorch nn.LSTM + Linear semantics."""
    B, T, D = x.shape
    H = w_hh.shape[1]
    h = jnp.zeros((B, H), jnp.float32)
    c = jnp.zeros((B, H), jnp.float32)
    for t in range(T):
        gates = x[:, t, :] @ w_ih.T + b_ih + h @ w_hh.T + b_hh
        i = jax.nn.sigmoid(gates[:, 0:H])
        f = jax.nn.sigmoid(gates[:, H:2 * H])
        g = jnp.tanh(gates[:, 2 * H:3 * H])
        o = jax.nn.sigmoid(gates[:, 3 * H:4 * H])
        c = f * c + i * g
        h = o * jnp.tanh(c)
    return h @ w_fc.T + b_fc


if __name__ == "__main__":
    # Small shapes implied by the module: batch=2, seq=8, input_dim=16,
    # hidden_dim=32, output_dim=8.
    B, T, D, H, O = 2, 8, 16, 32, 8

    key = jax.random.PRNGKey(0)
    ks = jax.random.split(key, 7)
    scale = 1.0 / jnp.sqrt(H)
    x     = jax.random.normal(ks[0], (B, T, D), jnp.float32)
    w_ih  = jax.random.uniform(ks[1], (4 * H, D), jnp.float32, -scale, scale)
    w_hh  = jax.random.uniform(ks[2], (4 * H, H), jnp.float32, -scale, scale)
    b_ih  = jax.random.uniform(ks[3], (4 * H,),   jnp.float32, -scale, scale)
    b_hh  = jax.random.uniform(ks[4], (4 * H,),   jnp.float32, -scale, scale)
    w_fc  = jax.random.uniform(ks[5], (O, H),     jnp.float32, -scale, scale)
    b_fc  = jax.random.uniform(ks[6], (O,),       jnp.float32, -scale, scale)

    # One-time param prep (not part of the per-forward path).
    params = jax.block_until_ready(prepare_params(w_ih, w_hh, b_ih, b_hh, w_fc, b_fc))

    fwd = jax.jit(simple_lstm_forward)
    out = jax.block_until_ready(fwd(x, params))

    ref = _reference_forward(x, w_ih, w_hh, b_ih, b_hh, w_fc, b_fc)
    assert out.shape == (B, O)
    # bf16 MXU operands (f32 accumulation / f32 state) -> loosened tolerance.
    assert jnp.allclose(out, ref, atol=5e-2, rtol=5e-2), "mismatch vs reference"

    print("KERNEL_OK")
</pallas_src>

<mosaic_0001>
module attributes {stable_mosaic.version = 11 : i64} {
  func.func @lstm_kernel(%arg0: memref<2x8x16xf32, #tpu.memory_space<vmem>>, %arg1: memref<16x128xbf16, #tpu.memory_space<vmem>>, %arg2: memref<32x128xbf16, #tpu.memory_space<vmem>>, %arg3: memref<1x128xf32, #tpu.memory_space<vmem>>, %arg4: memref<32x8xbf16, #tpu.memory_space<vmem>>, %arg5: memref<1x8xf32, #tpu.memory_space<vmem>>, %arg6: memref<2x8xf32, #tpu.memory_space<vmem>>) attributes {dimension_semantics = [], scalar_prefetch = 0 : i64, scratch_operands = 0 : i64, tpu.core_type = #tpu.core_type<tc>} {
    %c0 = arith.constant 0 : index
    %c0_0 = arith.constant 0 : index
    %c0_1 = arith.constant 0 : index
    %0 = vector.load %arg0[%c0, %c0_0, %c0_1] : memref<2x8x16xf32, #tpu.memory_space<vmem>>, vector<2x8x16xf32>
    %1 = arith.truncf %0 : vector<2x8x16xf32> to vector<2x8x16xbf16>
    %2 = vector.shape_cast %1 : vector<2x8x16xbf16> to vector<16x16xbf16>
    %c0_2 = arith.constant 0 : index
    %c0_3 = arith.constant 0 : index
    %3 = vector.load %arg1[%c0_2, %c0_3] : memref<16x128xbf16, #tpu.memory_space<vmem>>, vector<16x128xbf16>
    %cst = arith.constant dense<0.000000e+00> : vector<16x128xf32>
    %4 = tpu.matmul %2, %3, %cst {dimension_numbers = #tpu.dot_dimension_numbers<[1], [0], [0], [1], [0, 0, 1, 1], [], []>} : vector<16x16xbf16>, vector<16x128xbf16>, vector<16x128xf32> -> vector<16x128xf32>
    %5 = vector.shape_cast %4 : vector<16x128xf32> to vector<2x8x128xf32>
    %c0_4 = arith.constant 0 : index
    %c0_5 = arith.constant 0 : index
    %6 = vector.load %arg3[%c0_4, %c0_5] : memref<1x128xf32, #tpu.memory_space<vmem>>, vector<1x128xf32>
    %7 = vector.shape_cast %6 : vector<1x128xf32> to vector<1x1x128xf32>
    %8 = vector.broadcast %7 : vector<1x1x128xf32> to vector<2x8x128xf32>
    %9 = arith.addf %5, %8 : vector<2x8x128xf32>
    %c0_6 = arith.constant 0 : index
    %c0_7 = arith.constant 0 : index
    %10 = vector.load %arg2[%c0_6, %c0_7] : memref<32x128xbf16, #tpu.memory_space<vmem>>, vector<32x128xbf16>
    %11 = vector.extract_strided_slice %9 {offsets = [0, 0, 0], sizes = [2, 1, 128], strides = [1, 1, 1]} : vector<2x8x128xf32> to vector<2x1x128xf32>
    %12 = vector.shape_cast %11 : vector<2x1x128xf32> to vector<2x128xf32>
    %cst_8 = arith.constant 5.000000e-01 : f32
    %13 = vector.broadcast %cst_8 : f32 to vector<2x128xf32>
    %14 = arith.mulf %13, %12 : vector<2x128xf32>
    %15 = math.tanh %14 : vector<2x128xf32>
    %cst_9 = arith.constant 1.000000e+00 : f32
    %16 = vector.broadcast %cst_9 : f32 to vector<2x128xf32>
    %17 = arith.addf %15, %16 : vector<2x128xf32>
    %cst_10 = arith.constant 5.000000e-01 : f32
    %18 = vector.broadcast %cst_10 : f32 to vector<2x128xf32>
    %19 = arith.mulf %18, %17 : vector<2x128xf32>
    %20 = vector.extract_strided_slice %19 {offsets = [0, 0], sizes = [2, 32], strides = [1, 1]} : vector<2x128xf32> to vector<2x32xf32>
    %21 = vector.extract_strided_slice %12 {offsets = [0, 64], sizes = [2, 32], strides = [1, 1]} : vector<2x128xf32> to vector<2x32xf32>
    %22 = math.tanh %21 : vector<2x32xf32>
    %23 = arith.mulf %20, %22 : vector<2x32xf32>
    %24 = vector.extract_strided_slice %19 {offsets = [0, 96], sizes = [2, 32], strides = [1, 1]} : vector<2x128xf32> to vector<2x32xf32>
    %25 = math.tanh %23 : vector<2x32xf32>
    %26 = arith.mulf %24, %25 : vector<2x32xf32>
    %27 = vector.extract_strided_slice %9 {offsets = [0, 1, 0], sizes = [2, 1, 128], strides = [1, 1, 1]} : vector<2x8x128xf32> to vector<2x1x128xf32>
    %28 = vector.shape_cast %27 : vector<2x1x128xf32> to vector<2x128xf32>
    %29 = arith.truncf %26 : vector<2x32xf32> to vector<2x32xbf16>
    %cst_11 = arith.constant dense<0.000000e+00> : vector<2x128xf32>
    %30 = tpu.matmul %29, %10, %cst_11 {dimension_numbers = #tpu.dot_dimension_numbers<[1], [0], [0], [1], [0, 0, 1, 1], [], []>} : vector<2x32xbf16>, vector<32x128xbf16>, vector<2x128xf32> -> vector<2x128xf32>
    %31 = arith.addf %28, %30 : vector<2x128xf32>
    %cst_12 = arith.constant 5.000000e-01 : f32
    %32 = vector.broadcast %cst_12 : f32 to vector<2x128xf32>
    %33 = arith.mulf %32, %31 : vector<2x128xf32>
    %34 = math.tanh %33 : vector<2x128xf32>
    %cst_13 = arith.constant 1.000000e+00 : f32
    %35 = vector.broadcast %cst_13 : f32 to vector<2x128xf32>
    %36 = arith.addf %34, %35 : vector<2x128xf32>
    %cst_14 = arith.constant 5.000000e-01 : f32
    %37 = vector.broadcast %cst_14 : f32 to vector<2x128xf32>
    %38 = arith.mulf %37, %36 : vector<2x128xf32>
    %39 = vector.extract_strided_slice %38 {offsets = [0, 0], sizes = [2, 32], strides = [1, 1]} : vector<2x128xf32> to vector<2x32xf32>
    %40 = vector.extract_strided_slice %38 {offsets = [0, 32], sizes = [2, 32], strides = [1, 1]} : vector<2x128xf32> to vector<2x32xf32>
    %41 = vector.extract_strided_slice %38 {offsets = [0, 96], sizes = [2, 32], strides = [1, 1]} : vector<2x128xf32> to vector<2x32xf32>
    %42 = vector.extract_strided_slice %31 {offsets = [0, 64], sizes = [2, 32], strides = [1, 1]} : vector<2x128xf32> to vector<2x32xf32>
    %43 = math.tanh %42 : vector<2x32xf32>
    %44 = arith.mulf %40, %23 : vector<2x32xf32>
    %45 = arith.mulf %39, %43 : vector<2x32xf32>
    %46 = arith.addf %44, %45 : vector<2x32xf32>
    %47 = math.tanh %46 : vector<2x32xf32>
    %48 = arith.mulf %41, %47 : vector<2x32xf32>
    %49 = vector.extract_strided_slice %9 {offsets = [0, 2, 0], sizes = [2, 1, 128], strides = [1, 1, 1]} : vector<2x8x128xf32> to vector<2x1x128xf32>
    %50 = vector.shape_cast %49 : vector<2x1x128xf32> to vector<2x128xf32>
    %51 = arith.truncf %48 : vector<2x32xf32> to vector<2x32xbf16>
    %cst_15 = arith.constant dense<0.000000e+00> : vector<2x128xf32>
    %52 = tpu.matmul %51, %10, %cst_15 {dimension_numbers = #tpu.dot_dimension_numbers<[1], [0], [0], [1], [0, 0, 1, 1], [], []>} : vector<2x32xbf16>, vector<32x128xbf16>, vector<2x128xf32> -> vector<2x128xf32>
    %53 = arith.addf %50, %52 : vector<2x128xf32>
    %cst_16 = arith.constant 5.000000e-01 : f32
    %54 = vector.broadcast %cst_16 : f32 to vector<2x128xf32>
    %55 = arith.mulf %54, %53 : vector<2x128xf32>
    %56 = math.tanh %55 : vector<2x128xf32>
    %cst_17 = arith.constant 1.000000e+00 : f32
    %57 = vector.broadcast %cst_17 : f32 to vector<2x128xf32>
    %58 = arith.addf %56, %57 : vector<2x128xf32>
    %cst_18 = arith.constant 5.000000e-01 : f32
    %59 = vector.broadcast %cst_18 : f32 to vector<2x128xf32>
    %60 = arith.mulf %59, %58 : vector<2x128xf32>
    %61 = vector.extract_strided_slice %60 {offsets = [0, 0], sizes = [2, 32], strides = [1, 1]} : vector<2x128xf32> to vector<2x32xf32>
    %62 = vector.extract_strided_slice %60 {offsets = [0, 32], sizes = [2, 32], strides = [1, 1]} : vector<2x128xf32> to vector<2x32xf32>
    %63 = vector.extract_strided_slice %60 {offsets = [0, 96], sizes = [2, 32], strides = [1, 1]} : vector<2x128xf32> to vector<2x32xf32>
    %64 = vector.extract_strided_slice %53 {offsets = [0, 64], sizes = [2, 32], strides = [1, 1]} : vector<2x128xf32> to vector<2x32xf32>
    %65 = math.tanh %64 : vector<2x32xf32>
    %66 = arith.mulf %62, %46 : vector<2x32xf32>
    %67 = arith.mulf %61, %65 : vector<2x32xf32>
    %68 = arith.addf %66, %67 : vector<2x32xf32>
    %69 = math.tanh %68 : vector<2x32xf32>
    %70 = arith.mulf %63, %69 : vector<2x32xf32>
    %71 = vector.extract_strided_slice %9 {offsets = [0, 3, 0], sizes = [2, 1, 128], strides = [1, 1, 1]} : vector<2x8x128xf32> to vector<2x1x128xf32>
    %72 = vector.shape_cast %71 : vector<2x1x128xf32> to vector<2x128xf32>
    %73 = arith.truncf %70 : vector<2x32xf32> to vector<2x32xbf16>
    %cst_19 = arith.constant dense<0.000000e+00> : vector<2x128xf32>
    %74 = tpu.matmul %73, %10, %cst_19 {dimension_numbers = #tpu.dot_dimension_numbers<[1], [0], [0], [1], [0, 0, 1, 1], [], []>} : vector<2x32xbf16>, vector<32x128xbf16>, vector<2x128xf32> -> vector<2x128xf32>
    %75 = arith.addf %72, %74 : vector<2x128xf32>
    %cst_20 = arith.constant 5.000000e-01 : f32
    %76 = vector.broadcast %cst_20 : f32 to vector<2x128xf32>
    %77 = arith.mulf %76, %75 : vector<2x128xf32>
    %78 = math.tanh %77 : vector<2x128xf32>
    %cst_21 = arith.constant 1.000000e+00 : f32
    %79 = vector.broadcast %cst_21 : f32 to vector<2x128xf32>
    %80 = arith.addf %78, %79 : vector<2x128xf32>
    %cst_22 = arith.constant 5.000000e-01 : f32
    %81 = vector.broadcast %cst_22 : f32 to vector<2x128xf32>
    %82 = arith.mulf %81, %80 : vector<2x128xf32>
    %83 = vector.extract_strided_slice %82 {offsets = [0, 0], sizes = [2, 32], strides = [1, 1]} : vector<2x128xf32> to vector<2x32xf32>
    %84 = vector.extract_strided_slice %82 {offsets = [0, 32], sizes = [2, 32], strides = [1, 1]} : vector<2x128xf32> to vector<2x32xf32>
    %85 = vector.extract_strided_slice %82 {offsets = [0, 96], sizes = [2, 32], strides = [1, 1]} : vector<2x128xf32> to vector<2x32xf32>
    %86 = vector.extract_strided_slice %75 {offsets = [0, 64], sizes = [2, 32], strides = [1, 1]} : vector<2x128xf32> to vector<2x32xf32>
    %87 = math.tanh %86 : vector<2x32xf32>
    %88 = arith.mulf %84, %68 : vector<2x32xf32>
    %89 = arith.mulf %83, %87 : vector<2x32xf32>
    %90 = arith.addf %88, %89 : vector<2x32xf32>
    %91 = math.tanh %90 : vector<2x32xf32>
    %92 = arith.mulf %85, %91 : vector<2x32xf32>
    %93 = vector.extract_strided_slice %9 {offsets = [0, 4, 0], sizes = [2, 1, 128], strides = [1, 1, 1]} : vector<2x8x128xf32> to vector<2x1x128xf32>
    %94 = vector.shape_cast %93 : vector<2x1x128xf32> to vector<2x128xf32>
    %95 = arith.truncf %92 : vector<2x32xf32> to vector<2x32xbf16>
    %cst_23 = arith.constant dense<0.000000e+00> : vector<2x128xf32>
    %96 = tpu.matmul %95, %10, %cst_23 {dimension_numbers = #tpu.dot_dimension_numbers<[1], [0], [0], [1], [0, 0, 1, 1], [], []>} : vector<2x32xbf16>, vector<32x128xbf16>, vector<2x128xf32> -> vector<2x128xf32>
    %97 = arith.addf %94, %96 : vector<2x128xf32>
    %cst_24 = arith.constant 5.000000e-01 : f32
    %98 = vector.broadcast %cst_24 : f32 to vector<2x128xf32>
    %99 = arith.mulf %98, %97 : vector<2x128xf32>
    %100 = math.tanh %99 : vector<2x128xf32>
    %cst_25 = arith.constant 1.000000e+00 : f32
    %101 = vector.broadcast %cst_25 : f32 to vector<2x128xf32>
    %102 = arith.addf %100, %101 : vector<2x128xf32>
    %cst_26 = arith.constant 5.000000e-01 : f32
    %103 = vector.broadcast %cst_26 : f32 to vector<2x128xf32>
    %104 = arith.mulf %103, %102 : vector<2x128xf32>
    %105 = vector.extract_strided_slice %104 {offsets = [0, 0], sizes = [2, 32], strides = [1, 1]} : vector<2x128xf32> to vector<2x32xf32>
    %106 = vector.extract_strided_slice %104 {offsets = [0, 32], sizes = [2, 32], strides = [1, 1]} : vector<2x128xf32> to vector<2x32xf32>
    %107 = vector.extract_strided_slice %104 {offsets = [0, 96], sizes = [2, 32], strides = [1, 1]} : vector<2x128xf32> to vector<2x32xf32>
    %108 = vector.extract_strided_slice %97 {offsets = [0, 64], sizes = [2, 32], strides = [1, 1]} : vector<2x128xf32> to vector<2x32xf32>
    %109 = math.tanh %108 : vector<2x32xf32>
    %110 = arith.mulf %106, %90 : vector<2x32xf32>
    %111 = arith.mulf %105, %109 : vector<2x32xf32>
    %112 = arith.addf %110, %111 : vector<2x32xf32>
    %113 = math.tanh %112 : vector<2x32xf32>
    %114 = arith.mulf %107, %113 : vector<2x32xf32>
    %115 = vector.extract_strided_slice %9 {offsets = [0, 5, 0], sizes = [2, 1, 128], strides = [1, 1, 1]} : vector<2x8x128xf32> to vector<2x1x128xf32>
    %116 = vector.shape_cast %115 : vector<2x1x128xf32> to vector<2x128xf32>
    %117 = arith.truncf %114 : vector<2x32xf32> to vector<2x32xbf16>
    %cst_27 = arith.constant dense<0.000000e+00> : vector<2x128xf32>
    %118 = tpu.matmul %117, %10, %cst_27 {dimension_numbers = #tpu.dot_dimension_numbers<[1], [0], [0], [1], [0, 0, 1, 1], [], []>} : vector<2x32xbf16>, vector<32x128xbf16>, vector<2x128xf32> -> vector<2x128xf32>
    %119 = arith.addf %116, %118 : vector<2x128xf32>
    %cst_28 = arith.constant 5.000000e-01 : f32
    %120 = vector.broadcast %cst_28 : f32 to vector<2x128xf32>
    %121 = arith.mulf %120, %119 : vector<2x128xf32>
    %122 = math.tanh %121 : vector<2x128xf32>
    %cst_29 = arith.constant 1.000000e+00 : f32
    %123 = vector.broadcast %cst_29 : f32 to vector<2x128xf32>
    %124 = arith.addf %122, %123 : vector<2x128xf32>
    %cst_30 = arith.constant 5.000000e-01 : f32
    %125 = vector.broadcast %cst_30 : f32 to vector<2x128xf32>
    %126 = arith.mulf %125, %124 : vector<2x128xf32>
    %127 = vector.extract_strided_slice %126 {offsets = [0, 0], sizes = [2, 32], strides = [1, 1]} : vector<2x128xf32> to vector<2x32xf32>
    %128 = vector.extract_strided_slice %126 {offsets = [0, 32], sizes = [2, 32], strides = [1, 1]} : vector<2x128xf32> to vector<2x32xf32>
    %129 = vector.extract_strided_slice %126 {offsets = [0, 96], sizes = [2, 32], strides = [1, 1]} : vector<2x128xf32> to vector<2x32xf32>
    %130 = vector.extract_strided_slice %119 {offsets = [0, 64], sizes = [2, 32], strides = [1, 1]} : vector<2x128xf32> to vector<2x32xf32>
    %131 = math.tanh %130 : vector<2x32xf32>
    %132 = arith.mulf %128, %112 : vector<2x32xf32>
    %133 = arith.mulf %127, %131 : vector<2x32xf32>
    %134 = arith.addf %132, %133 : vector<2x32xf32>
    %135 = math.tanh %134 : vector<2x32xf32>
    %136 = arith.mulf %129, %135 : vector<2x32xf32>
    %137 = vector.extract_strided_slice %9 {offsets = [0, 6, 0], sizes = [2, 1, 128], strides = [1, 1, 1]} : vector<2x8x128xf32> to vector<2x1x128xf32>
    %138 = vector.shape_cast %137 : vector<2x1x128xf32> to vector<2x128xf32>
    %139 = arith.truncf %136 : vector<2x32xf32> to vector<2x32xbf16>
    %cst_31 = arith.constant dense<0.000000e+00> : vector<2x128xf32>
    %140 = tpu.matmul %139, %10, %cst_31 {dimension_numbers = #tpu.dot_dimension_numbers<[1], [0], [0], [1], [0, 0, 1, 1], [], []>} : vector<2x32xbf16>, vector<32x128xbf16>, vector<2x128xf32> -> vector<2x128xf32>
    %141 = arith.addf %138, %140 : vector<2x128xf32>
    %cst_32 = arith.constant 5.000000e-01 : f32
    %142 = vector.broadcast %cst_32 : f32 to vector<2x128xf32>
    %143 = arith.mulf %142, %141 : vector<2x128xf32>
    %144 = math.tanh %143 : vector<2x128xf32>
    %cst_33 = arith.constant 1.000000e+00 : f32
    %145 = vector.broadcast %cst_33 : f32 to vector<2x128xf32>
    %146 = arith.addf %144, %145 : vector<2x128xf32>
    %cst_34 = arith.constant 5.000000e-01 : f32
    %147 = vector.broadcast %cst_34 : f32 to vector<2x128xf32>
    %148 = arith.mulf %147, %146 : vector<2x128xf32>
    %149 = vector.extract_strided_slice %148 {offsets = [0, 0], sizes = [2, 32], strides = [1, 1]} : vector<2x128xf32> to vector<2x32xf32>
    %150 = vector.extract_strided_slice %148 {offsets = [0, 32], sizes = [2, 32], strides = [1, 1]} : vector<2x128xf32> to vector<2x32xf32>
    %151 = vector.extract_strided_slice %148 {offsets = [0, 96], sizes = [2, 32], strides = [1, 1]} : vector<2x128xf32> to vector<2x32xf32>
    %152 = vector.extract_strided_slice %141 {offsets = [0, 64], sizes = [2, 32], strides = [1, 1]} : vector<2x128xf32> to vector<2x32xf32>
    %153 = math.tanh %152 : vector<2x32xf32>
    %154 = arith.mulf %150, %134 : vector<2x32xf32>
    %155 = arith.mulf %149, %153 : vector<2x32xf32>
    %156 = arith.addf %154, %155 : vector<2x32xf32>
    %157 = math.tanh %156 : vector<2x32xf32>
    %158 = arith.mulf %151, %157 : vector<2x32xf32>
    %159 = vector.extract_strided_slice %9 {offsets = [0, 7, 0], sizes = [2, 1, 128], strides = [1, 1, 1]} : vector<2x8x128xf32> to vector<2x1x128xf32>
    %160 = vector.shape_cast %159 : vector<2x1x128xf32> to vector<2x128xf32>
    %161 = arith.truncf %158 : vector<2x32xf32> to vector<2x32xbf16>
    %cst_35 = arith.constant dense<0.000000e+00> : vector<2x128xf32>
    %162 = tpu.matmul %161, %10, %cst_35 {dimension_numbers = #tpu.dot_dimension_numbers<[1], [0], [0], [1], [0, 0, 1, 1], [], []>} : vector<2x32xbf16>, vector<32x128xbf16>, vector<2x128xf32> -> vector<2x128xf32>
    %163 = arith.addf %160, %162 : vector<2x128xf32>
    %cst_36 = arith.constant 5.000000e-01 : f32
    %164 = vector.broadcast %cst_36 : f32 to vector<2x128xf32>
    %165 = arith.mulf %164, %163 : vector<2x128xf32>
    %166 = math.tanh %165 : vector<2x128xf32>
    %cst_37 = arith.constant 1.000000e+00 : f32
    %167 = vector.broadcast %cst_37 : f32 to vector<2x128xf32>
    %168 = arith.addf %166, %167 : vector<2x128xf32>
    %cst_38 = arith.constant 5.000000e-01 : f32
    %169 = vector.broadcast %cst_38 : f32 to vector<2x128xf32>
    %170 = arith.mulf %169, %168 : vector<2x128xf32>
    %171 = vector.extract_strided_slice %170 {offsets = [0, 0], sizes = [2, 32], strides = [1, 1]} : vector<2x128xf32> to vector<2x32xf32>
    %172 = vector.extract_strided_slice %170 {offsets = [0, 32], sizes = [2, 32], strides = [1, 1]} : vector<2x128xf32> to vector<2x32xf32>
    %173 = vector.extract_strided_slice %170 {offsets = [0, 96], sizes = [2, 32], strides = [1, 1]} : vector<2x128xf32> to vector<2x32xf32>
    %174 = vector.extract_strided_slice %163 {offsets = [0, 64], sizes = [2, 32], strides = [1, 1]} : vector<2x128xf32> to vector<2x32xf32>
    %175 = math.tanh %174 : vector<2x32xf32>
    %176 = arith.mulf %172, %156 : vector<2x32xf32>
    %177 = arith.mulf %171, %175 : vector<2x32xf32>
    %178 = arith.addf %176, %177 : vector<2x32xf32>
    %179 = math.tanh %178 : vector<2x32xf32>
    %180 = arith.mulf %173, %179 : vector<2x32xf32>
    %181 = arith.truncf %180 : vector<2x32xf32> to vector<2x32xbf16>
    %c0_39 = arith.constant 0 : index
    %c0_40 = arith.constant 0 : index
    %182 = vector.load %arg4[%c0_39, %c0_40] : memref<32x8xbf16, #tpu.memory_space<vmem>>, vector<32x8xbf16>
    %cst_41 = arith.constant dense<0.000000e+00> : vector<2x8xf32>
    %183 = tpu.matmul %181, %182, %cst_41 {dimension_numbers = #tpu.dot_dimension_numbers<[1], [0], [0], [1], [0, 0, 1, 1], [], []>} : vector<2x32xbf16>, vector<32x8xbf16>, vector<2x8xf32> -> vector<2x8xf32>
    %c0_42 = arith.constant 0 : index
    %c0_43 = arith.constant 0 : index
    %184 = vector.load %arg5[%c0_42, %c0_43] : memref<1x8xf32, #tpu.memory_space<vmem>>, vector<1x8xf32>
    %185 = vector.broadcast %184 : vector<1x8xf32> to vector<2x8xf32>
    %186 = arith.addf %183, %185 : vector<2x8xf32>
    %c0_44 = arith.constant 0 : index
    %c0_45 = arith.constant 0 : index
    %187 = vector.load %arg6[%c0_44, %c0_45] : memref<2x8xf32, #tpu.memory_space<vmem>>, vector<2x8xf32>
    tpu.vector_store %arg6[%c0_44, %c0_45], %186 {strides = array<i32>} : memref<2x8xf32, #tpu.memory_space<vmem>>, vector<2x8xf32>,
    return
  }
}

</mosaic_0001>

<llo_original>
// kernel: simple_lstm_forward.1
$region0: #{simple_lstm_forward.1}
  #allocation0 [shape = 'u32[]', space=smem, size = 0x4, offset = 0x4, fixed_abs, tag = 'smem constant byte address 0x4 - core index']
  #allocation1 [shape = 'u32[144,128]{1,0:T(1,128)}', space=vmem, size = 0x12000, scoped, tag = 'internal scratch']
  %s0 = inlined_call_operand.vmem [shape: f32[2,8,16], index: 0, kind: input, shape index: {}]
  %s1 = inlined_call_operand.hbm [shape: bf16[16,128], index: 1, kind: input, shape index: {}]
  %s2 = inlined_call_operand.hbm [shape: bf16[32,128], index: 2, kind: input, shape index: {}]
  %s3 = inlined_call_operand.vmem [shape: f32[1,128], index: 3, kind: input, shape index: {}]
  %s4 = inlined_call_operand.vmem [shape: bf16[32,8], index: 4, kind: input, shape index: {}]
  %s5 = inlined_call_operand.vmem [shape: f32[1,8], index: 5, kind: input, shape index: {}]
  %s6 = inlined_call_operand.hbm [shape: f32[2,8], index: 6, kind: output, shape index: {}]
  %s7 = sld [smem:[#allocation0]]
  $region42: #{simple_lstm_forward.1} parent=0
    _
  %s9 = ssub.s32 1, %s7
  %s10 = scalar_select 0, %s9, %s7
  $region1: #{simple_lstm_forward.1} parent=0
    #allocation2 [shape = 'u8[4096]{0}', space=vmem, size = 0x1000, scoped, tag = 'input window, operand 1, single buffered']
    #allocation3 [shape = 's32[1]{0}', space=sflag, size = 0x4, scoped, tag = 'scoped memory for simple_lstm_forward.1']
    #allocation4 [shape = 's32[1]{0}', space=sflag, size = 0x4, scoped, tag = 'scoped memory for simple_lstm_forward.1']
    #allocation5 [shape = 'u8[8192]{0}', space=vmem, size = 0x2000, scoped, tag = 'input window, operand 2, single buffered']
    #allocation6 [shape = 's32[1]{0}', space=sflag, size = 0x4, scoped, tag = 'scoped memory for simple_lstm_forward.1']
    #allocation7 [shape = 'u8[1024]{0}', space=vmem, size = 0x400, scoped, tag = 'output window, operand 0, single buffered']
    %11 = vsyncpa [#allocation3], 0
    %12 = vsyncpa [#allocation6], 0
    %13 = vsyncpa [#allocation4], 0
    // Predicated region
    $region2: #{simple_lstm_forward.1} parent=1 // pred_check
      _
    $region3: #{simple_lstm_forward.1} parent=1 // pred_check_branch
      %15 = sbr.rel (0) target = $region5
    $region4: #{simple_lstm_forward.1} parent=1 // pred_region
      _
    $region5: #{simple_lstm_forward.1} parent=1 // pred_fallthru
      _
    // Predicated region
    $region6: #{simple_lstm_forward.1} parent=1 // pred_check
      _
    $region7: #{simple_lstm_forward.1} parent=1 // pred_check_branch
      %17 = sbr.rel (0) target = $region9
    $region8: #{simple_lstm_forward.1} parent=1 // pred_region
      %s19 = ssub.s32 128, 128
      %20 = vsyncadd [#allocation3], %s19
      %s21 = sshll.u32 [#allocation2], 4
      %s22 = int_to_ptr.vmem [resolvable:$true] %s21
      %27 = dma.hbm_to_vmem [thread:$0]  %s1, 128, %s22, [#allocation3], 64, 64, 4
    $region9: #{simple_lstm_forward.1} parent=1 // pred_fallthru
      _
    // Predicated region
    $region10: #{simple_lstm_forward.1} parent=1 // pred_check
      _
    $region11: #{simple_lstm_forward.1} parent=1 // pred_check_branch
      %29 = sbr.rel (0) target = $region13
    $region12: #{simple_lstm_forward.1} parent=1 // pred_region
      %s31 = ssub.s32 256, 256
      %32 = vsyncadd [#allocation6], %s31
      %s33 = sshll.u32 [#allocation5], 4
      %s34 = int_to_ptr.vmem [resolvable:$true] %s33
      %39 = dma.hbm_to_vmem [thread:$0]  %s2, 256, %s34, [#allocation6], 64, 64, 4
    $region13: #{simple_lstm_forward.1} parent=1 // pred_fallthru
      _
    // Predicated region
    $region14: #{simple_lstm_forward.1} parent=1 // pred_check
      _
    $region15: #{simple_lstm_forward.1} parent=1 // pred_check_branch
      %41 = sbr.rel (0) target = $region17
    $region16: #{simple_lstm_forward.1} parent=1 // pred_region
      _
    $region17: #{simple_lstm_forward.1} parent=1 // pred_fallthru
      _
    // Predicated region
    $region18: #{simple_lstm_forward.1} parent=1 // pred_check
      _
    $region19: #{simple_lstm_forward.1} parent=1 // pred_check_branch
      %43 = sbr.rel (0) target = $region21
    $region20: #{simple_lstm_forward.1} parent=1 // pred_region
      _
    $region21: #{simple_lstm_forward.1} parent=1 // pred_fallthru
      _
    // Predicated region
    $region22: #{simple_lstm_forward.1} parent=1 // pred_check
      _
    $region23: #{simple_lstm_forward.1} parent=1 // pred_check_branch
      %45 = sbr.rel (0) target = $region25
    $region24: #{simple_lstm_forward.1} parent=1 // pred_region
      _
    $region25: #{simple_lstm_forward.1} parent=1 // pred_fallthru
      _
    // Predicated region
    $region26: #{simple_lstm_forward.1} parent=1 // pred_check
      _
    $region27: #{simple_lstm_forward.1} parent=1 // pred_check_branch
      %47 = sbr.rel (0) target = $region29
    $region28: #{simple_lstm_forward.1} parent=1 // pred_region
      %48 = dma.done [#allocation3], 128
    $region29: #{simple_lstm_forward.1} parent=1 // pred_fallthru
      _
    // Predicated region
    $region30: #{simple_lstm_forward.1} parent=1 // pred_check
      _
    $region31: #{simple_lstm_forward.1} parent=1 // pred_check_branch
      %50 = sbr.rel (0) target = $region33
    $region32: #{simple_lstm_forward.1} parent=1 // pred_region
      %51 = dma.done [#allocation6], 256
    $region33: #{simple_lstm_forward.1} parent=1 // pred_fallthru
      _
    %v53 = vld [vmem:[%s0] sm:$0xff]
    %v54 = vld [vmem:[%s0 + $0x8] sm:$0xff]
    %v55 = vpack.c.bf16 %v53, %v53
    %v56 = vpack.c.bf16 %v54, %v54
    %v57 = vld [vmem:[#allocation2] sm:$0xf]
    %v58 = vld [vmem:[#allocation2 + $0x4] sm:$0xf]
    %v61 = vunpack.c.l.b16 %v55
    %v62 = vunpack.c.l.b16 %v56
    %v63 = vpack.c.b16 %v62, %v61
    %v66 = vunpack.c.l.b16 %v57
    %v67 = vunpack.c.l.b16 %v58
    %v68 = vpack.c.b16 %v67, %v66
    %vm70 = vcmask 130048
    %v72 = vsel %vm70, %v63, 0
    %74 = vmatprep.subr.bf16.mxu0 0
    %75 = vmatpush1.bf16.msra.mxu0 %v68
    %76 = vmatprep.subr.bf16.mxu0 0
    %77 = vmatpush1.bf16.msra.mxu0 0
    %78 = vmatprep.subr.bf16.mxu0 0
    %79 = vmatpush1.bf16.msra.mxu0 0
    %80 = vmatprep.subr.bf16.mxu0 0
    %81 = vmatpush1.bf16.msra.mxu0 0
    %82 = vmatprep.subr.bf16.mxu0 0
    %83 = vmatpush1.bf16.msra.mxu0 0
    %84 = vmatprep.subr.bf16.mxu0 0
    %85 = vmatpush1.bf16.msra.mxu0 0
    %86 = vmatprep.subr.bf16.mxu0 0
    %87 = vmatpush1.bf16.msra.mxu0 0
    %88 = vmatprep.subr.bf16.mxu0 0
    %89 = vmatpush1.bf16.msra.mxu0 0
    %90 = vmatprep.subr.bf16.mxu0 0
    %91 = vmatpush1.bf16.msra.mxu0 0
    %92 = vmatprep.subr.bf16.mxu0 0
    %93 = vmatpush1.bf16.msra.mxu0 0
    %94 = vmatprep.subr.bf16.mxu0 0
    %95 = vmatpush1.bf16.msra.mxu0 0
    %96 = vmatprep.subr.bf16.mxu0 0
    %97 = vmatpush1.bf16.msra.mxu0 0
    %98 = vmatprep.subr.bf16.mxu0 0
    %99 = vmatpush1.bf16.msra.mxu0 0
    %100 = vmatprep.subr.bf16.mxu0 0
    %101 = vmatpush1.bf16.msra.mxu0 0
    %102 = vmatprep.subr.bf16.mxu0 0
    %103 = vmatpush1.bf16.msra.mxu0 0
    %104 = vmatprep.subr.bf16.mxu0 0
    %105 = vmatpush1.bf16.msra.mxu0 0
    %106 = vmatprep.mubr.bf16.mxu0 0
    %107 = vmatmul.mubr.bf16.gmra.mrb[0].mxu0 %v72
    %v108 = vpop.f32.mrb[0].mxu0
    %v109 = vadd.f32 0.0, %v108
    %v110 = vpop.f32.mrb[0].mxu0
    %v111 = vpop.f32.mrb[0].mxu0
    %v112 = vadd.f32 0.0, %v111
    %v113 = vpop.f32.mrb[0].mxu0
    %114 = vdwg.mxu0
    %v115 = vld [vmem:[%s3] sm:$0x1]
    %v117 = vlaneseq
    %v118 = vshrl.u32 %v117, 7
    %v119 = vsub.s32 0, %v118
    %v120 = vrot.slane %v115, %v119
    %v122 = vadd.f32 %v109, %v120
    %v123 = vadd.f32 %v112, %v120
    %v124 = vld [vmem:[#allocation5] sm:$0xf]
    %v125 = vld [vmem:[#allocation5 + $0x4] sm:$0xf]
    %v126 = vld [vmem:[#allocation5 + $0x8] sm:$0xf]
    %v127 = vld [vmem:[#allocation5 + $0xc] sm:$0xf]
    %v128 = vmul.f32 %v122, 0.5
    %v129 = vmul.f32 %v123, 0.5
    %v130 = vtanh.pop %v128
    %v131 = vtanh.pop %v129
    %v132 = vadd.f32 %v130, 1.0
    %v133 = vadd.f32 %v131, 1.0
    %v134 = vmul.f32 %v132, 0.5
    %v135 = vmul.f32 %v133, 0.5
    %v136 = vtanh.pop %v122
    %v137 = vtanh.pop %v123
    %140 = vrot.lane.b32.xlu0 %v136, 64
    %v141 = vpop.permute.xlu0 %140
    %142 = vrot.lane.b32.xlu0 %v137, 64
    %v143 = vpop.permute.xlu0 %142
    %v146 = vmul.f32 %v134, %v141
    %v147 = vmul.f32 %v135, %v143
    %v148 = vtanh.pop %v146
    %v149 = vtanh.pop %v147
    %152 = vrot.lane.b32.xlu0 %v148, 96
    %v153 = vpop.permute.xlu0 %152
    %154 = vrot.lane.b32.xlu0 %v149, 96
    %v155 = vpop.permute.xlu0 %154
    %v158 = vmul.f32 %v134, %v153
    %v159 = vmul.f32 %v135, %v155
    %v160 = vpack.c.bf16 %v158, %v158
    %v161 = vpack.c.bf16 %v159, %v159
    %v164 = vunpack.c.l.b16 %v160
    %v165 = vunpack.c.l.b16 %v161
    %v166 = vrot.slane %v165, 7
    %vm167 = vcmask 1041409
    %v168 = vsel %vm167, %v166, %v164
    %v169 = vpack.c.b16 %v168, %v168
    %170 = vrot.lane.b32.xlu0 %v169, 32
    %v171 = vpop.permute.xlu0 %170
    %v176 = vunpack.c.l.b16 %v124
    %v177 = vunpack.c.l.b16 %v125
    %v178 = vunpack.c.l.b16 %v126
    %v179 = vunpack.c.l.b16 %v127
    %v180 = vpack.c.b16 %v177, %v176
    %v181 = vpack.c.b16 %v179, %v178
    %vm184 = vcmask 261120
    %v186 = vsel %vm184, %v171, 0
    %188 = vmatprep.subr.bf16.mxu0 0
    %189 = vmatpush1.bf16.msra.mxu0 %v180
    %190 = vmatprep.subr.bf16.mxu0 0
    %191 = vmatpush1.bf16.msra.mxu0 %v181
    %192 = vmatprep.subr.bf16.mxu0 0
    %193 = vmatpush1.bf16.msra.mxu0 0
    %194 = vmatprep.subr.bf16.mxu0 0
    %195 = vmatpush1.bf16.msra.mxu0 0
    %196 = vmatprep.subr.bf16.mxu0 0
    %197 = vmatpush1.bf16.msra.mxu0 0
    %198 = vmatprep.subr.bf16.mxu0 0
    %199 = vmatpush1.bf16.msra.mxu0 0
    %200 = vmatprep.subr.bf16.mxu0 0
    %201 = vmatpush1.bf16.msra.mxu0 0
    %202 = vmatprep.subr.bf16.mxu0 0
    %203 = vmatpush1.bf16.msra.mxu0 0
    %204 = vmatprep.subr.bf16.mxu0 0
    %205 = vmatpush1.bf16.msra.mxu0 0
    %206 = vmatprep.subr.bf16.mxu0 0
    %207 = vmatpush1.bf16.msra.mxu0 0
    %208 = vmatprep.subr.bf16.mxu0 0
    %209 = vmatpush1.bf16.msra.mxu0 0
    %210 = vmatprep.subr.bf16.mxu0 0
    %211 = vmatpush1.bf16.msra.mxu0 0
    %212 = vmatprep.subr.bf16.mxu0 0
    %213 = vmatpush1.bf16.msra.mxu0 0
    %214 = vmatprep.subr.bf16.mxu0 0
    %215 = vmatpush1.bf16.msra.mxu0 0
    %216 = vmatprep.subr.bf16.mxu0 0
    %217 = vmatpush1.bf16.msra.mxu0 0
    %218 = vmatprep.subr.bf16.mxu0 0
    %219 = vmatpush1.bf16.msra.mxu0 0
    %220 = vmatprep.mubr.bf16.mxu0 0
    %221 = vmatmul.mubr.bf16.gmra.mrb[0].mxu0 %v186
    %v222 = vpop.f32.mrb[0].mxu0
    %v223 = vadd.f32 0.0, %v222
    %v224 = vpop.f32.mrb[0].mxu0
    %v225 = vpop.f32.mrb[0].mxu0
    %v226 = vpop.f32.mrb[0].mxu0
    %227 = vdwg.mxu0
    %v229 = vrot.slane %v223, 7
    %v232 = vadd.f32 %v122, %v229
    %v233 = vadd.f32 %v123, %v223
    %v234 = vmul.f32 %v232, 0.5
    %v235 = vmul.f32 %v233, 0.5
    %v236 = vtanh.pop %v234
    %v237 = vtanh.pop %v235
    %v238 = vadd.f32 %v236, 1.0
    %v239 = vadd.f32 %v237, 1.0
    %v240 = vmul.f32 %v238, 0.5
    %v241 = vmul.f32 %v239, 0.5
    %v242 = vtanh.pop %v232
    %v243 = vtanh.pop %v233
    %v246 = vrot.slane %v146, 7
    %v247 = vrot.slane %v147, 7
    %248 = vrot.lane.b32.xlu0 %v246, 32
    %v249 = vpop.permute.xlu0 %248
    %250 = vrot.lane.b32.xlu0 %v247, 32
    %v251 = vpop.permute.xlu0 %250
    %v254 = vmul.f32 %v240, %v249
    %v255 = vmul.f32 %v241, %v251
    %258 = vrot.lane.b32.xlu0 %v242, 64
    %v259 = vpop.permute.xlu0 %258
    %260 = vrot.lane.b32.xlu0 %v243, 64
    %v261 = vpop.permute.xlu0 %260
    %v264 = vmul.f32 %v240, %v259
    %v265 = vmul.f32 %v241, %v261
    %268 = vrot.lane.b32.xlu0 %v264, 32
    %v269 = vpop.permute.xlu0 %268
    %270 = vrot.lane.b32.xlu0 %v265, 32
    %v271 = vpop.permute.xlu0 %270
    %v274 = vadd.f32 %v254, %v269
    %v275 = vadd.f32 %v255, %v271
    %v276 = vtanh.pop %v274
    %v277 = vtanh.pop %v275
    %280 = vrot.lane.b32.xlu0 %v276, 64
    %v281 = vpop.permute.xlu0 %280
    %282 = vrot.lane.b32.xlu0 %v277, 64
    %v283 = vpop.permute.xlu0 %282
    %v286 = vmul.f32 %v240, %v281
    %v287 = vmul.f32 %v241, %v283
    %v288 = vpack.c.bf16 %v286, %v286
    %v289 = vpack.c.bf16 %v287, %v287
    %v292 = vunpack.c.l.b16 %v288
    %v293 = vunpack.c.l.b16 %v289
    %v294 = vrot.slane %v292, 1
    %v295 = vsel %vm167, %v293, %v294
    %v296 = vpack.c.b16 %v295, %v295
    %297 = vrot.lane.b32.xlu0 %v296, 32
    %v298 = vpop.permute.xlu0 %297
    %v300 = vsel %vm184, %v298, 0
    %302 = vmatprep.subr.bf16.mxu0 0
    %303 = vmatpush1.bf16.msra.mxu0 %v180
    %304 = vmatprep.subr.bf16.mxu0 0
    %305 = vmatpush1.bf16.msra.mxu0 %v181
    %306 = vmatprep.subr.bf16.mxu0 0
    %307 = vmatpush1.bf16.msra.mxu0 0
    %308 = vmatprep.subr.bf16.mxu0 0
    %309 = vmatpush1.bf16.msra.mxu0 0
    %310 = vmatprep.subr.bf16.mxu0 0
    %311 = vmatpush1.bf16.msra.mxu0 0
    %312 = vmatprep.subr.bf16.mxu0 0
    %313 = vmatpush1.bf16.msra.mxu0 0
    %314 = vmatprep.subr.bf16.mxu0 0
    %315 = vmatpush1.bf16.msra.mxu0 0
    %316 = vmatprep.subr.bf16.mxu0 0
    %317 = vmatpush1.bf16.msra.mxu0 0
    %318 = vmatprep.subr.bf16.mxu0 0
    %319 = vmatpush1.bf16.msra.mxu0 0
    %320 = vmatprep.subr.bf16.mxu0 0
    %321 = vmatpush1.bf16.msra.mxu0 0
    %322 = vmatprep.subr.bf16.mxu0 0
    %323 = vmatpush1.bf16.msra.mxu0 0
    %324 = vmatprep.subr.bf16.mxu0 0
    %325 = vmatpush1.bf16.msra.mxu0 0
    %326 = vmatprep.subr.bf16.mxu0 0
    %327 = vmatpush1.bf16.msra.mxu0 0
    %328 = vmatprep.subr.bf16.mxu0 0
    %329 = vmatpush1.bf16.msra.mxu0 0
    %330 = vmatprep.subr.bf16.mxu0 0
    %331 = vmatpush1.bf16.msra.mxu0 0
    %332 = vmatprep.subr.bf16.mxu0 0
    %333 = vmatpush1.bf16.msra.mxu0 0
    %334 = vmatprep.mubr.bf16.mxu0 0
    %335 = vmatmul.mubr.bf16.gmra.mrb[0].mxu0 %v300
    %v336 = vpop.f32.mrb[0].mxu0
    %v337 = vadd.f32 0.0, %v336
    %v338 = vpop.f32.mrb[0].mxu0
    %v339 = vpop.f32.mrb[0].mxu0
    %v340 = vpop.f32.mrb[0].mxu0
    %341 = vdwg.mxu0
    %v343 = vrot.slane %v337, 6
    %v344 = vrot.slane %v337, 7
    %v347 = vadd.f32 %v122, %v343
    %v348 = vadd.f32 %v123, %v344
    %v349 = vmul.f32 %v347, 0.5
    %v350 = vmul.f32 %v348, 0.5
    %v351 = vtanh.pop %v349
    %v352 = vtanh.pop %v350
    %v353 = vadd.f32 %v351, 1.0
    %v354 = vadd.f32 %v352, 1.0
    %v355 = vmul.f32 %v353, 0.5
    %v356 = vmul.f32 %v354, 0.5
    %v357 = vtanh.pop %v347
    %v358 = vtanh.pop %v348
    %v361 = vrot.slane %v274, 7
    %v362 = vrot.slane %v275, 7
    %v365 = vmul.f32 %v355, %v361
    %v366 = vmul.f32 %v356, %v362
    %369 = vrot.lane.b32.xlu0 %v357, 64
    %v370 = vpop.permute.xlu0 %369
    %371 = vrot.lane.b32.xlu0 %v358, 64
    %v372 = vpop.permute.xlu0 %371
    %v375 = vmul.f32 %v355, %v370
    %v376 = vmul.f32 %v356, %v372
    %379 = vrot.lane.b32.xlu0 %v375, 32
    %v380 = vpop.permute.xlu0 %379
    %381 = vrot.lane.b32.xlu0 %v376, 32
    %v382 = vpop.permute.xlu0 %381
    %v385 = vadd.f32 %v365, %v380
    %v386 = vadd.f32 %v366, %v382
    %v387 = vtanh.pop %v385
    %v388 = vtanh.pop %v386
    %391 = vrot.lane.b32.xlu0 %v387, 64
    %v392 = vpop.permute.xlu0 %391
    %393 = vrot.lane.b32.xlu0 %v388, 64
    %v394 = vpop.permute.xlu0 %393
    %v397 = vmul.f32 %v355, %v392
    %v398 = vmul.f32 %v356, %v394
    %v399 = vpack.c.bf16 %v397, %v397
    %v400 = vpack.c.bf16 %v398, %v398
    %v403 = vunpack.c.l.b16 %v399
    %v404 = vunpack.c.l.b16 %v400
    %v405 = vrot.slane %v403, 2
    %v406 = vrot.slane %v404, 1
    %v407 = vsel %vm167, %v406, %v405
    %v408 = vpack.c.b16 %v407, %v407
    %409 = vrot.lane.b32.xlu0 %v408, 32
    %v410 = vpop.permute.xlu0 %409
    %v412 = vsel %vm184, %v410, 0
    %414 = vmatprep.subr.bf16.mxu0 0
    %415 = vmatpush1.bf16.msra.mxu0 %v180
    %416 = vmatprep.subr.bf16.mxu0 0
    %417 = vmatpush1.bf16.msra.mxu0 %v181
    %418 = vmatprep.subr.bf16.mxu0 0
    %419 = vmatpush1.bf16.msra.mxu0 0
    %420 = vmatprep.subr.bf16.mxu0 0
    %421 = vmatpush1.bf16.msra.mxu0 0
    %422 = vmatprep.subr.bf16.mxu0 0
    %423 = vmatpush1.bf16.msra.mxu0 0
    %424 = vmatprep.subr.bf16.mxu0 0
    %425 = vmatpush1.bf16.msra.mxu0 0
    %426 = vmatprep.subr.bf16.mxu0 0
    %427 = vmatpush1.bf16.msra.mxu0 0
    %428 = vmatprep.subr.bf16.mxu0 0
    %429 = vmatpush1.bf16.msra.mxu0 0
    %430 = vmatprep.subr.bf16.mxu0 0
    %431 = vmatpush1.bf16.msra.mxu0 0
    %432 = vmatprep.subr.bf16.mxu0 0
    %433 = vmatpush1.bf16.msra.mxu0 0
    %434 = vmatprep.subr.bf16.mxu0 0
    %435 = vmatpush1.bf16.msra.mxu0 0
    %436 = vmatprep.subr.bf16.mxu0 0
    %437 = vmatpush1.bf16.msra.mxu0 0
    %438 = vmatprep.subr.bf16.mxu0 0
    %439 = vmatpush1.bf16.msra.mxu0 0
    %440 = vmatprep.subr.bf16.mxu0 0
    %441 = vmatpush1.bf16.msra.mxu0 0
    %442 = vmatprep.subr.bf16.mxu0 0
    %443 = vmatpush1.bf16.msra.mxu0 0
    %444 = vmatprep.subr.bf16.mxu0 0
    %445 = vmatpush1.bf16.msra.mxu0 0
    %446 = vmatprep.mubr.bf16.mxu0 0
    %447 = vmatmul.mubr.bf16.gmra.mrb[0].mxu0 %v412
    %v448 = vpop.f32.mrb[0].mxu0
    %v449 = vadd.f32 0.0, %v448
    %v450 = vpop.f32.mrb[0].mxu0
    %v451 = vpop.f32.mrb[0].mxu0
    %v452 = vpop.f32.mrb[0].mxu0
    %453 = vdwg.mxu0
    %v455 = vrot.slane %v449, 5
    %v456 = vrot.slane %v449, 6
    %v459 = vadd.f32 %v122, %v455
    %v460 = vadd.f32 %v123, %v456
    %v461 = vmul.f32 %v459, 0.5
    %v462 = vmul.f32 %v460, 0.5
    %v463 = vtanh.pop %v461
    %v464 = vtanh.pop %v462
    %v465 = vadd.f32 %v463, 1.0
    %v466 = vadd.f32 %v464, 1.0
    %v467 = vmul.f32 %v465, 0.5
    %v468 = vmul.f32 %v466, 0.5
    %v469 = vtanh.pop %v459
    %v470 = vtanh.pop %v460
    %v473 = vrot.slane %v385, 7
    %v474 = vrot.slane %v386, 7
    %v477 = vmul.f32 %v467, %v473
    %v478 = vmul.f32 %v468, %v474
    %481 = vrot.lane.b32.xlu0 %v469, 64
    %v482 = vpop.permute.xlu0 %481
    %483 = vrot.lane.b32.xlu0 %v470, 64
    %v484 = vpop.permute.xlu0 %483
    %v487 = vmul.f32 %v467, %v482
    %v488 = vmul.f32 %v468, %v484
    %491 = vrot.lane.b32.xlu0 %v487, 32
    %v492 = vpop.permute.xlu0 %491
    %493 = vrot.lane.b32.xlu0 %v488, 32
    %v494 = vpop.permute.xlu0 %493
    %v497 = vadd.f32 %v477, %v492
    %v498 = vadd.f32 %v478, %v494
    %v499 = vtanh.pop %v497
    %v500 = vtanh.pop %v498
    %503 = vrot.lane.b32.xlu0 %v499, 64
    %v504 = vpop.permute.xlu0 %503
    %505 = vrot.lane.b32.xlu0 %v500, 64
    %v506 = vpop.permute.xlu0 %505
    %v509 = vmul.f32 %v467, %v504
    %v510 = vmul.f32 %v468, %v506
    %v511 = vpack.c.bf16 %v509, %v509
    %v512 = vpack.c.bf16 %v510, %v510
    %v515 = vunpack.c.l.b16 %v511
    %v516 = vunpack.c.l.b16 %v512
    %v517 = vrot.slane %v515, 3
    %v518 = vrot.slane %v516, 2
    %v519 = vsel %vm167, %v518, %v517
    %v520 = vpack.c.b16 %v519, %v519
    %521 = vrot.lane.b32.xlu0 %v520, 32
    %v522 = vpop.permute.xlu0 %521
    %v524 = vsel %vm184, %v522, 0
    %526 = vmatprep.subr.bf16.mxu0 0
    %527 = vmatpush1.bf16.msra.mxu0 %v180
    %528 = vmatprep.subr.bf16.mxu0 0
    %529 = vmatpush1.bf16.msra.mxu0 %v181
    %530 = vmatprep.subr.bf16.mxu0 0
    %531 = vmatpush1.bf16.msra.mxu0 0
    %532 = vmatprep.subr.bf16.mxu0 0
    %533 = vmatpush1.bf16.msra.mxu0 0
    %534 = vmatprep.subr.bf16.mxu0 0
    %535 = vmatpush1.bf16.msra.mxu0 0
    %536 = vmatprep.subr.bf16.mxu0 0
    %537 = vmatpush1.bf16.msra.mxu0 0
    %538 = vmatprep.subr.bf16.mxu0 0
    %539 = vmatpush1.bf16.msra.mxu0 0
    %540 = vmatprep.subr.bf16.mxu0 0
    %541 = vmatpush1.bf16.msra.mxu0 0
    %542 = vmatprep.subr.bf16.mxu0 0
    %543 = vmatpush1.bf16.msra.mxu0 0
    %544 = vmatprep.subr.bf16.mxu0 0
    %545 = vmatpush1.bf16.msra.mxu0 0
    %546 = vmatprep.subr.bf16.mxu0 0
    %547 = vmatpush1.bf16.msra.mxu0 0
    %548 = vmatprep.subr.bf16.mxu0 0
    %549 = vmatpush1.bf16.msra.mxu0 0
    %550 = vmatprep.subr.bf16.mxu0 0
    %551 = vmatpush1.bf16.msra.mxu0 0
    %552 = vmatprep.subr.bf16.mxu0 0
    %553 = vmatpush1.bf16.msra.mxu0 0
    %554 = vmatprep.subr.bf16.mxu0 0
    %555 = vmatpush1.bf16.msra.mxu0 0
    %556 = vmatprep.subr.bf16.mxu0 0
    %557 = vmatpush1.bf16.msra.mxu0 0
    %558 = vmatprep.mubr.bf16.mxu0 0
    %559 = vmatmul.mubr.bf16.gmra.mrb[0].mxu0 %v524
    %v560 = vpop.f32.mrb[0].mxu0
    %v561 = vadd.f32 0.0, %v560
    %v562 = vpop.f32.mrb[0].mxu0
    %v563 = vpop.f32.mrb[0].mxu0
    %v564 = vpop.f32.mrb[0].mxu0
    %565 = vdwg.mxu0
    %v567 = vrot.slane %v561, 4
    %v568 = vrot.slane %v561, 5
    %v571 = vadd.f32 %v122, %v567
    %v572 = vadd.f32 %v123, %v568
    %v573 = vmul.f32 %v571, 0.5
    %v574 = vmul.f32 %v572, 0.5
    %v575 = vtanh.pop %v573
    %v576 = vtanh.pop %v574
    %v577 = vadd.f32 %v575, 1.0
    %v578 = vadd.f32 %v576, 1.0
    %v579 = vmul.f32 %v577, 0.5
    %v580 = vmul.f32 %v578, 0.5
    %v581 = vtanh.pop %v571
    %v582 = vtanh.pop %v572
    %v585 = vrot.slane %v497, 7
    %v586 = vrot.slane %v498, 7
    %v589 = vmul.f32 %v579, %v585
    %v590 = vmul.f32 %v580, %v586
    %593 = vrot.lane.b32.xlu0 %v581, 64
    %v594 = vpop.permute.xlu0 %593
    %595 = vrot.lane.b32.xlu0 %v582, 64
    %v596 = vpop.permute.xlu0 %595
    %v599 = vmul.f32 %v579, %v594
    %v600 = vmul.f32 %v580, %v596
    %603 = vrot.lane.b32.xlu0 %v599, 32
    %v604 = vpop.permute.xlu0 %603
    %605 = vrot.lane.b32.xlu0 %v600, 32
    %v606 = vpop.permute.xlu0 %605
    %v609 = vadd.f32 %v589, %v604
    %v610 = vadd.f32 %v590, %v606
    %v611 = vtanh.pop %v609
    %v612 = vtanh.pop %v610
    %615 = vrot.lane.b32.xlu0 %v611, 64
    %v616 = vpop.permute.xlu0 %615
    %617 = vrot.lane.b32.xlu0 %v612, 64
    %v618 = vpop.permute.xlu0 %617
    %v621 = vmul.f32 %v579, %v616
    %v622 = vmul.f32 %v580, %v618
    %v623 = vpack.c.bf16 %v621, %v621
    %v624 = vpack.c.bf16 %v622, %v622
    %v627 = vunpack.c.l.b16 %v623
    %v628 = vunpack.c.l.b16 %v624
    %v629 = vrot.slane %v627, 4
    %v630 = vrot.slane %v628, 3
    %v631 = vsel %vm167, %v630, %v629
    %v632 = vpack.c.b16 %v631, %v631
    %633 = vrot.lane.b32.xlu0 %v632, 32
    %v634 = vpop.permute.xlu0 %633
    %v636 = vsel %vm184, %v634, 0
    %638 = vmatprep.subr.bf16.mxu0 0
    %639 = vmatpush1.bf16.msra.mxu0 %v180
    %640 = vmatprep.subr.bf16.mxu0 0
    %641 = vmatpush1.bf16.msra.mxu0 %v181
    %642 = vmatprep.subr.bf16.mxu0 0
    %643 = vmatpush1.bf16.msra.mxu0 0
    %644 = vmatprep.subr.bf16.mxu0 0
    %645 = vmatpush1.bf16.msra.mxu0 0
    %646 = vmatprep.subr.bf16.mxu0 0
    %647 = vmatpush1.bf16.msra.mxu0 0
    %648 = vmatprep.subr.bf16.mxu0 0
    %649 = vmatpush1.bf16.msra.mxu0 0
    %650 = vmatprep.subr.bf16.mxu0 0
    %651 = vmatpush1.bf16.msra.mxu0 0
    %652 = vmatprep.subr.bf16.mxu0 0
    %653 = vmatpush1.bf16.msra.mxu0 0
    %654 = vmatprep.subr.bf16.mxu0 0
    %655 = vmatpush1.bf16.msra.mxu0 0
    %656 = vmatprep.subr.bf16.mxu0 0
    %657 = vmatpush1.bf16.msra.mxu0 0
    %658 = vmatprep.subr.bf16.mxu0 0
    %659 = vmatpush1.bf16.msra.mxu0 0
    %660 = vmatprep.subr.bf16.mxu0 0
    %661 = vmatpush1.bf16.msra.mxu0 0
    %662 = vmatprep.subr.bf16.mxu0 0
    %663 = vmatpush1.bf16.msra.mxu0 0
    %664 = vmatprep.subr.bf16.mxu0 0
    %665 = vmatpush1.bf16.msra.mxu0 0
    %666 = vmatprep.subr.bf16.mxu0 0
    %667 = vmatpush1.bf16.msra.mxu0 0
    %668 = vmatprep.subr.bf16.mxu0 0
    %669 = vmatpush1.bf16.msra.mxu0 0
    %670 = vmatprep.mubr.bf16.mxu0 0
    %671 = vmatmul.mubr.bf16.gmra.mrb[0].mxu0 %v636
    %v672 = vpop.f32.mrb[0].mxu0
    %v673 = vadd.f32 0.0, %v672
    %v674 = vpop.f32.mrb[0].mxu0
    %v675 = vpop.f32.mrb[0].mxu0
    %v676 = vpop.f32.mrb[0].mxu0
    %677 = vdwg.mxu0
    %v679 = vrot.slane %v673, 3
    %v680 = vrot.slane %v673, 4
    %v683 = vadd.f32 %v122, %v679
    %v684 = vadd.f32 %v123, %v680
    %v685 = vmul.f32 %v683, 0.5
    %v686 = vmul.f32 %v684, 0.5
    %v687 = vtanh.pop %v685
    %v688 = vtanh.pop %v686
    %v689 = vadd.f32 %v687, 1.0
    %v690 = vadd.f32 %v688, 1.0
    %v691 = vmul.f32 %v689, 0.5
    %v692 = vmul.f32 %v690, 0.5
    %v693 = vtanh.pop %v683
    %v694 = vtanh.pop %v684
    %v697 = vrot.slane %v609, 7
    %v698 = vrot.slane %v610, 7
    %v701 = vmul.f32 %v691, %v697
    %v702 = vmul.f32 %v692, %v698
    %705 = vrot.lane.b32.xlu0 %v693, 64
    %v706 = vpop.permute.xlu0 %705
    %707 = vrot.lane.b32.xlu0 %v694, 64
    %v708 = vpop.permute.xlu0 %707
    %v711 = vmul.f32 %v691, %v706
    %v712 = vmul.f32 %v692, %v708
    %715 = vrot.lane.b32.xlu0 %v711, 32
    %v716 = vpop.permute.xlu0 %715
    %717 = vrot.lane.b32.xlu0 %v712, 32
    %v718 = vpop.permute.xlu0 %717
    %v721 = vadd.f32 %v701, %v716
    %v722 = vadd.f32 %v702, %v718
    %v723 = vtanh.pop %v721
    %v724 = vtanh.pop %v722
    %727 = vrot.lane.b32.xlu0 %v723, 64
    %v728 = vpop.permute.xlu0 %727
    %729 = vrot.lane.b32.xlu0 %v724, 64
    %v730 = vpop.permute.xlu0 %729
    %v733 = vmul.f32 %v691, %v728
    %v734 = vmul.f32 %v692, %v730
    %v735 = vpack.c.bf16 %v733, %v733
    %v736 = vpack.c.bf16 %v734, %v734
    %v739 = vunpack.c.l.b16 %v735
    %v740 = vunpack.c.l.b16 %v736
    %v741 = vrot.slane %v739, 5
    %v742 = vrot.slane %v740, 4
    %v743 = vsel %vm167, %v742, %v741
    %v744 = vpack.c.b16 %v743, %v743
    %745 = vrot.lane.b32.xlu0 %v744, 32
    %v746 = vpop.permute.xlu0 %745
    %v748 = vsel %vm184, %v746, 0
    %750 = vmatprep.subr.bf16.mxu0 0
    %751 = vmatpush1.bf16.msra.mxu0 %v180
    %752 = vmatprep.subr.bf16.mxu0 0
    %753 = vmatpush1.bf16.msra.mxu0 %v181
    %754 = vmatprep.subr.bf16.mxu0 0
    %755 = vmatpush1.bf16.msra.mxu0 0
    %756 = vmatprep.subr.bf16.mxu0 0
    %757 = vmatpush1.bf16.msra.mxu0 0
    %758 = vmatprep.subr.bf16.mxu0 0
    %759 = vmatpush1.bf16.msra.mxu0 0
    %760 = vmatprep.subr.bf16.mxu0 0
    %761 = vmatpush1.bf16.msra.mxu0 0
    %762 = vmatprep.subr.bf16.mxu0 0
    %763 = vmatpush1.bf16.msra.mxu0 0
    %764 = vmatprep.subr.bf16.mxu0 0
    %765 = vmatpush1.bf16.msra.mxu0 0
    %766 = vmatprep.subr.bf16.mxu0 0
    %767 = vmatpush1.bf16.msra.mxu0 0
    %768 = vmatprep.subr.bf16.mxu0 0
    %769 = vmatpush1.bf16.msra.mxu0 0
    %770 = vmatprep.subr.bf16.mxu0 0
    %771 = vmatpush1.bf16.msra.mxu0 0
    %772 = vmatprep.subr.bf16.mxu0 0
    %773 = vmatpush1.bf16.msra.mxu0 0
    %774 = vmatprep.subr.bf16.mxu0 0
    %775 = vmatpush1.bf16.msra.mxu0 0
    %776 = vmatprep.subr.bf16.mxu0 0
    %777 = vmatpush1.bf16.msra.mxu0 0
    %778 = vmatprep.subr.bf16.mxu0 0
    %779 = vmatpush1.bf16.msra.mxu0 0
    %780 = vmatprep.subr.bf16.mxu0 0
    %781 = vmatpush1.bf16.msra.mxu0 0
    %782 = vmatprep.mubr.bf16.mxu0 0
    %783 = vmatmul.mubr.bf16.gmra.mrb[0].mxu0 %v748
    %v784 = vpop.f32.mrb[0].mxu0
    %v785 = vadd.f32 0.0, %v784
    %v786 = vpop.f32.mrb[0].mxu0
    %v787 = vpop.f32.mrb[0].mxu0
    %v788 = vpop.f32.mrb[0].mxu0
    %789 = vdwg.mxu0
    %v791 = vrot.slane %v785, 2
    %v792 = vrot.slane %v785, 3
    %v795 = vadd.f32 %v122, %v791
    %v796 = vadd.f32 %v123, %v792
    %v797 = vmul.f32 %v795, 0.5
    %v798 = vmul.f32 %v796, 0.5
    %v799 = vtanh.pop %v797
    %v800 = vtanh.pop %v798
    %v801 = vadd.f32 %v799, 1.0
    %v802 = vadd.f32 %v800, 1.0
    %v803 = vmul.f32 %v801, 0.5
    %v804 = vmul.f32 %v802, 0.5
    %v805 = vtanh.pop %v795
    %v806 = vtanh.pop %v796
    %v809 = vrot.slane %v721, 7
    %v810 = vrot.slane %v722, 7
    %v813 = vmul.f32 %v803, %v809
    %v814 = vmul.f32 %v804, %v810
    %817 = vrot.lane.b32.xlu0 %v805, 64
    %v818 = vpop.permute.xlu0 %817
    %819 = vrot.lane.b32.xlu0 %v806, 64
    %v820 = vpop.permute.xlu0 %819
    %v823 = vmul.f32 %v803, %v818
    %v824 = vmul.f32 %v804, %v820
    %827 = vrot.lane.b32.xlu0 %v823, 32
    %v828 = vpop.permute.xlu0 %827
    %829 = vrot.lane.b32.xlu0 %v824, 32
    %v830 = vpop.permute.xlu0 %829
    %v833 = vadd.f32 %v813, %v828
    %v834 = vadd.f32 %v814, %v830
    %v835 = vtanh.pop %v833
    %v836 = vtanh.pop %v834
    %839 = vrot.lane.b32.xlu0 %v835, 64
    %v840 = vpop.permute.xlu0 %839
    %841 = vrot.lane.b32.xlu0 %v836, 64
    %v842 = vpop.permute.xlu0 %841
    %v845 = vmul.f32 %v803, %v840
    %v846 = vmul.f32 %v804, %v842
    %v847 = vpack.c.bf16 %v845, %v845
    %v848 = vpack.c.bf16 %v846, %v846
    %v851 = vunpack.c.l.b16 %v847
    %v852 = vunpack.c.l.b16 %v848
    %v853 = vrot.slane %v851, 6
    %v854 = vrot.slane %v852, 5
    %v855 = vsel %vm167, %v854, %v853
    %v856 = vpack.c.b16 %v855, %v855
    %857 = vrot.lane.b32.xlu0 %v856, 32
    %v858 = vpop.permute.xlu0 %857
    %v860 = vsel %vm184, %v858, 0
    %862 = vmatprep.subr.bf16.mxu0 0
    %863 = vmatpush1.bf16.msra.mxu0 %v180
    %864 = vmatprep.subr.bf16.mxu0 0
    %865 = vmatpush1.bf16.msra.mxu0 %v181
    %866 = vmatprep.subr.bf16.mxu0 0
    %867 = vmatpush1.bf16.msra.mxu0 0
    %868 = vmatprep.subr.bf16.mxu0 0
    %869 = vmatpush1.bf16.msra.mxu0 0
    %870 = vmatprep.subr.bf16.mxu0 0
    %871 = vmatpush1.bf16.msra.mxu0 0
    %872 = vmatprep.subr.bf16.mxu0 0
    %873 = vmatpush1.bf16.msra.mxu0 0
    %874 = vmatprep.subr.bf16.mxu0 0
    %875 = vmatpush1.bf16.msra.mxu0 0
    %876 = vmatprep.subr.bf16.mxu0 0
    %877 = vmatpush1.bf16.msra.mxu0 0
    %878 = vmatprep.subr.bf16.mxu0 0
    %879 = vmatpush1.bf16.msra.mxu0 0
    %880 = vmatprep.subr.bf16.mxu0 0
    %881 = vmatpush1.bf16.msra.mxu0 0
    %882 = vmatprep.subr.bf16.mxu0 0
    %883 = vmatpush1.bf16.msra.mxu0 0
    %884 = vmatprep.subr.bf16.mxu0 0
    %885 = vmatpush1.bf16.msra.mxu0 0
    %886 = vmatprep.subr.bf16.mxu0 0
    %887 = vmatpush1.bf16.msra.mxu0 0
    %888 = vmatprep.subr.bf16.mxu0 0
    %889 = vmatpush1.bf16.msra.mxu0 0
    %890 = vmatprep.subr.bf16.mxu0 0
    %891 = vmatpush1.bf16.msra.mxu0 0
    %892 = vmatprep.subr.bf16.mxu0 0
    %893 = vmatpush1.bf16.msra.mxu0 0
    %894 = vmatprep.mubr.bf16.mxu0 0
    %895 = vmatmul.mubr.bf16.gmra.mrb[0].mxu0 %v860
    %v896 = vpop.f32.mrb[0].mxu0
    %v897 = vadd.f32 0.0, %v896
    %v898 = vpop.f32.mrb[0].mxu0
    %v899 = vpop.f32.mrb[0].mxu0
    %v900 = vpop.f32.mrb[0].mxu0
    %901 = vdwg.mxu0
    %v903 = vrot.slane %v897, 1
    %v904 = vrot.slane %v897, 2
    %v907 = vadd.f32 %v122, %v903
    %v908 = vadd.f32 %v123, %v904
    %v909 = vmul.f32 %v907, 0.5
    %v910 = vmul.f32 %v908, 0.5
    %v911 = vtanh.pop %v909
    %v912 = vtanh.pop %v910
    %v913 = vadd.f32 %v911, 1.0
    %v914 = vadd.f32 %v912, 1.0
    %v915 = vmul.f32 %v913, 0.5
    %v916 = vmul.f32 %v914, 0.5
    %v917 = vtanh.pop %v907
    %v918 = vtanh.pop %v908
    %v921 = vrot.slane %v833, 7
    %v922 = vrot.slane %v834, 7
    %v925 = vmul.f32 %v915, %v921
    %v926 = vmul.f32 %v916, %v922
    %929 = vrot.lane.b32.xlu0 %v917, 64
    %v930 = vpop.permute.xlu0 %929
    %931 = vrot.lane.b32.xlu0 %v918, 64
    %v932 = vpop.permute.xlu0 %931
    %v935 = vmul.f32 %v915, %v930
    %v936 = vmul.f32 %v916, %v932
    %939 = vrot.lane.b32.xlu0 %v935, 32
    %v940 = vpop.permute.xlu0 %939
    %941 = vrot.lane.b32.xlu0 %v936, 32
    %v942 = vpop.permute.xlu0 %941
    %v945 = vadd.f32 %v925, %v940
    %v946 = vadd.f32 %v926, %v942
    %v947 = vtanh.pop %v945
    %v948 = vtanh.pop %v946
    %951 = vrot.lane.b32.xlu0 %v947, 64
    %v952 = vpop.permute.xlu0 %951
    %953 = vrot.lane.b32.xlu0 %v948, 64
    %v954 = vpop.permute.xlu0 %953
    %v957 = vmul.f32 %v915, %v952
    %v958 = vmul.f32 %v916, %v954
    %v959 = vpack.c.bf16 %v957, %v957
    %v960 = vpack.c.bf16 %v958, %v958
    %v961 = vld [vmem:[%s4] sm:$0xf]
    %v962 = vld [vmem:[%s4 + $0x4] sm:$0xf]
    %v963 = vld [vmem:[%s4 + $0x8] sm:$0xf]
    %v964 = vld [vmem:[%s4 + $0xc] sm:$0xf]
    %v965 = vld [vmem:[%s5] sm:$0x1]
    %v967 = vlaneseq
    %v968 = vshrl.u32 %v967, 7
    %v969 = vsub.s32 0, %v968
    %v970 = vrot.slane %v965, %v969
    %v974 = vunpack.c.l.b16 %v959
    %v975 = vunpack.c.l.b16 %v960
    %v976 = vrot.slane %v974, 7
    %v977 = vrot.slane %v975, 6
    %v978 = vsel %vm167, %v977, %v976
    %v979 = vpack.c.b16 %v978, %v978
    %980 = vrot.lane.b32.xlu0 %v979, 32
    %v981 = vpop.permute.xlu0 %980
    %v986 = vunpack.c.l.b16 %v961
    %v987 = vunpack.c.l.b16 %v962
    %v988 = vunpack.c.l.b16 %v963
    %v989 = vunpack.c.l.b16 %v964
    %v990 = vpack.c.b16 %v987, %v986
    %v991 = vpack.c.b16 %v989, %v988
    %v995 = vsel %vm184, %v981, 0
    %997 = vmatprep.subr.bf16.mxu0 0
    %998 = vmatpush1.bf16.msra.mxu0 %v990
    %999 = vmatprep.subr.bf16.mxu0 0
    %1000 = vmatpush1.bf16.msra.mxu0 %v991
    %1001 = vmatprep.subr.bf16.mxu0 0
    %1002 = vmatpush1.bf16.msra.mxu0 0
    %1003 = vmatprep.subr.bf16.mxu0 0
    %1004 = vmatpush1.bf16.msra.mxu0 0
    %1005 = vmatprep.subr.bf16.mxu0 0
    %1006 = vmatpush1.bf16.msra.mxu0 0
    %1007 = vmatprep.subr.bf16.mxu0 0
    %1008 = vmatpush1.bf16.msra.mxu0 0
    %1009 = vmatprep.subr.bf16.mxu0 0
    %1010 = vmatpush1.bf16.msra.mxu0 0
    %1011 = vmatprep.subr.bf16.mxu0 0
    %1012 = vmatpush1.bf16.msra.mxu0 0
    %1013 = vmatprep.subr.bf16.mxu0 0
    %1014 = vmatpush1.bf16.msra.mxu0 0
    %1015 = vmatprep.subr.bf16.mxu0 0
    %1016 = vmatpush1.bf16.msra.mxu0 0
    %1017 = vmatprep.subr.bf16.mxu0 0
    %1018 = vmatpush1.bf16.msra.mxu0 0
    %1019 = vmatprep.subr.bf16.mxu0 0
    %1020 = vmatpush1.bf16.msra.mxu0 0
    %1021 = vmatprep.subr.bf16.mxu0 0
    %1022 = vmatpush1.bf16.msra.mxu0 0
    %1023 = vmatprep.subr.bf16.mxu0 0
    %1024 = vmatpush1.bf16.msra.mxu0 0
    %1025 = vmatprep.subr.bf16.mxu0 0
    %1026 = vmatpush1.bf16.msra.mxu0 0
    %1027 = vmatprep.subr.bf16.mxu0 0
    %1028 = vmatpush1.bf16.msra.mxu0 0
    %1029 = vmatprep.mubr.bf16.mxu0 0
    %1030 = vmatmul.mubr.bf16.gmra.mrb[0].mxu0 %v995
    %v1031 = vpop.f32.mrb[0].mxu0
    %v1032 = vadd.f32 %v970, %v1031
    %v1033 = vpop.f32.mrb[0].mxu0
    %v1034 = vpop.f32.mrb[0].mxu0
    %v1035 = vpop.f32.mrb[0].mxu0
    %1036 = vdwg.mxu0
    %vm1037 = vcmask 58368
    %1038 = vst.msk [vmem:[#allocation7] sm:$0x3] %vm1037, %v1032
    // Predicated region
    $region34: #{simple_lstm_forward.1} parent=1 // pred_check
      _
    $region35: #{simple_lstm_forward.1} parent=1 // pred_check_branch
      %1040 = sbr.rel (0) target = $region37
    $region36: #{simple_lstm_forward.1} parent=1 // pred_region
      %s1042 = ssub.s32 32, 32
      %1043 = vsyncadd [#allocation4], %s1042
      %s1045 = sshll.u32 [#allocation7], 4
      %s1046 = int_to_ptr.vmem [resolvable:$true] %s1045
      %1048 = dma.vmem_to_hbm [thread:$0]  %s1046, 32, %s6, [#allocation4]
    $region37: #{simple_lstm_forward.1} parent=1 // pred_fallthru
      _
    // Predicated region
    $region38: #{simple_lstm_forward.1} parent=1 // pred_check
      _
    $region39: #{simple_lstm_forward.1} parent=1 // pred_check_branch
      %1050 = sbr.rel (0) target = $region41
    $region40: #{simple_lstm_forward.1} parent=1 // pred_region
      %1051 = dma.done [#allocation4], 32
    $region41: #{simple_lstm_forward.1} parent=1 // pred_fallthru
      _
    %1052 = vsyncpa [#allocation3], 1
    %1053 = vsyncpa [#allocation6], 1
    %1054 = vsyncpa [#allocation4], 1

</llo_original>
